<compile_context>
chip_gen: v7x
topology: tpu7x:2x2x1
jax: 0.10.0
libtpu: 0.0.40
codegen_flags: <defaults>
</compile_context>

<pallas_src>
import functools

import jax
import jax.numpy as jnp
from jax.experimental import pallas as pl
from jax.experimental.pallas import tpu as pltpu

EPS = 1e-6


def _round_up(x: int, m: int) -> int:
    return ((x + m - 1) // m) * m


def _layernorm_kernel(x_ref, alpha_ref, bias_ref, o_ref, *, feats: int):
    # x_ref: (block_rows, F); alpha_ref / bias_ref: (1, F).
    # All reductions are strictly per-row (axis=-1), so stale/garbage rows in a
    # partial boundary block cannot contaminate valid rows (their writes are
    # masked by Pallas).
    x = x_ref[...].astype(jnp.float32)
    n = jnp.float32(feats)

    # Two-pass statistics for torch-parity numerics:
    #   mean, then unbiased variance sum((x - mean)^2) / (F - 1).
    mean = jnp.sum(x, axis=-1, keepdims=True) * (1.0 / n)
    xc = x - mean
    # NOTE: assumes feats >= 2 (torch.std with a single element is NaN anyway).
    var = jnp.sum(xc * xc, axis=-1, keepdims=True) * (1.0 / jnp.float32(feats - 1))
    std = jnp.sqrt(var)

    # Per-row reciprocal on the EUP slot; exact (approx=False) for torch parity.
    inv = pl.reciprocal(std + jnp.float32(EPS), approx=False)

    alpha = alpha_ref[...].astype(jnp.float32)
    bias = bias_ref[...].astype(jnp.float32)
    y = xc * (alpha * inv) + bias
    o_ref[...] = y.astype(o_ref.dtype)


def layer_norm_pallas(x, alpha, bias, *, target_block_rows: int = 1024):
    """LayerNormalization(features) forward. x: (B, S, F)."""
    B, S, F = x.shape
    rows = B * S

    x2 = x.reshape(rows, F)
    alpha2 = alpha.reshape(1, F)
    bias2 = bias.reshape(1, F)

    # --- VMEM budget: account for the f32 working set, not just input dtype ---
    # Per row of a block:
    #   2 double-buffered input rows + 2 double-buffered output rows (input dtype)
    #   + ~3 f32 tile-sized intermediates (x_f32, centered/squared, y).
    dtype_bytes = jnp.dtype(x.dtype).itemsize
    bytes_per_row = F * (4 * dtype_bytes + 3 * 4)
    budget = 12 * 1024 * 1024  # fits v5e's 16 MiB scoped default, v7x's 64 MiB phys.
    max_rows_by_vmem = max(8, (budget // bytes_per_row) // 8 * 8)

    block_rows = min(target_block_rows, max_rows_by_vmem)
    # Don't make the tile larger than the (rounded-up) row count.
    block_rows = max(8, min(block_rows, _round_up(rows, 8)))
    # Guarantee >= 2 grid steps whenever rows allow it, so the parallel row axis
    # can shard across both TensorCores on v7x.
    half_rows = _round_up(pl.cdiv(rows, 2), 8)
    block_rows = max(8, min(block_rows, half_rows))

    grid = (pl.cdiv(rows, block_rows),)

    kernel = functools.partial(_layernorm_kernel, feats=F)

    out2 = pl.pallas_call(
        kernel,
        out_shape=jax.ShapeDtypeStruct((rows, F), x.dtype),
        grid_spec=pltpu.PrefetchScalarGridSpec(
            num_scalar_prefetch=0,
            grid=grid,
            in_specs=[
                # Last dim = true F (full-array-dim exception); partial boundary
                # block on the row axis is masked by Pallas.
                pl.BlockSpec((block_rows, F), lambda i: (i, 0)),
                pl.BlockSpec((1, F), lambda i: (0, 0)),
                pl.BlockSpec((1, F), lambda i: (0, 0)),
            ],
            out_specs=pl.BlockSpec((block_rows, F), lambda i: (i, 0)),
        ),
        compiler_params=pltpu.CompilerParams(
            dimension_semantics=("parallel",),
            vmem_limit_bytes=32 * 1024 * 1024,
        ),
    )(x2, alpha2, bias2)

    return out2.reshape(B, S, F)


def decoder_forward(x, encoder_output, src_mask, tgt_mask, params, layers=()):
    """Decoder.forward: apply (externally supplied) layers, then LayerNorm."""
    for layer in layers:
        x = layer(x, encoder_output, src_mask, tgt_mask)
    return layer_norm_pallas(x, params["alpha"], params["bias"])


if __name__ == "__main__":
    # Small shapes: batch=2, tgt_seq=8, src_seq=8, features=32
    B, S_tgt, S_src, F = 2, 8, 8, 32

    key = jax.random.PRNGKey(0)
    k_x, k_enc = jax.random.split(key)
    x = jax.random.normal(k_x, (B, S_tgt, F), dtype=jnp.float32)
    encoder_output = jax.random.normal(k_enc, (B, S_src, F), dtype=jnp.float32)
    src_mask = jnp.ones((B, 1, S_tgt, S_src), dtype=jnp.float32)
    tgt_mask = jnp.tril(jnp.ones((S_tgt, S_tgt), dtype=jnp.float32))[None, None]

    # Deterministic parameter init matching nn.Parameter(torch.ones/zeros(features))
    params = {
        "alpha": jnp.ones((F,), dtype=jnp.float32),
        "bias": jnp.zeros((F,), dtype=jnp.float32),
    }

    out = decoder_forward(x, encoder_output, src_mask, tgt_mask, params, layers=())
    out = jax.block_until_ready(out)

    # Reference check in plain JAX (torch semantics: unbiased std, eps added to std)
    mean = jnp.mean(x, axis=-1, keepdims=True)
    std = jnp.sqrt(jnp.sum((x - mean) ** 2, axis=-1, keepdims=True) / (F - 1))
    ref = params["alpha"] * (x - mean) / (std + EPS) + params["bias"]
    assert out.shape == ref.shape, "shape mismatch vs reference"
    assert out.dtype == x.dtype, "dtype mismatch vs input"
    assert jnp.allclose(out, ref, atol=1e-5, rtol=1e-5), "mismatch vs reference"

    print("KERNEL_OK")
</pallas_src>

<mosaic_0001>
module attributes {stable_mosaic.version = 11 : i64} {
  func.func @_layernorm_kernel(%arg0: i32, %arg1: memref<8x32xf32, #tpu.memory_space<vmem>>, %arg2: memref<1x32xf32, #tpu.memory_space<vmem>>, %arg3: memref<1x32xf32, #tpu.memory_space<vmem>>, %arg4: memref<8x32xf32, #tpu.memory_space<vmem>>) attributes {dimension_semantics = [#tpu.dimension_semantics<parallel>], iteration_bounds = array<i64: 2>, scalar_prefetch = 0 : i64, scratch_operands = 0 : i64, tpu.core_type = #tpu.core_type<tc>, window_params = [{transform_indices = @transform_0, window_bounds = array<i64: 8, 32>}, {pipeline_mode = #tpu.pipeline_mode<synchronous>, transform_indices = @transform_1, window_bounds = array<i64: 1, 32>}, {pipeline_mode = #tpu.pipeline_mode<synchronous>, transform_indices = @transform_2, window_bounds = array<i64: 1, 32>}, {transform_indices = @transform_3, window_bounds = array<i64: 8, 32>}]} {
    %c0 = arith.constant 0 : index
    %c0_0 = arith.constant 0 : index
    %0 = vector.load %arg1[%c0, %c0_0] : memref<8x32xf32, #tpu.memory_space<vmem>>, vector<8x32xf32>
    %cst = arith.constant dense<0.000000e+00> : vector<8xf32>
    %1 = vector.multi_reduction <add>, %0, %cst [1] : vector<8x32xf32> to vector<8xf32>
    %2 = vector.shape_cast %1 : vector<8xf32> to vector<8x1xf32>
    %cst_1 = arith.constant 1.000000e+00 : f32
    %cst_2 = arith.constant 3.200000e+01 : f32
    %3 = arith.divf %cst_1, %cst_2 : f32
    %4 = vector.broadcast %3 : f32 to vector<8x1xf32>
    %5 = arith.mulf %2, %4 : vector<8x1xf32>
    %6 = vector.broadcast %5 : vector<8x1xf32> to vector<8x32xf32>
    %7 = arith.subf %0, %6 : vector<8x32xf32>
    %8 = arith.mulf %7, %7 : vector<8x32xf32>
    %cst_3 = arith.constant dense<0.000000e+00> : vector<8xf32>
    %9 = vector.multi_reduction <add>, %8, %cst_3 [1] : vector<8x32xf32> to vector<8xf32>
    %10 = vector.shape_cast %9 : vector<8xf32> to vector<8x1xf32>
    %cst_4 = arith.constant 1.000000e+00 : f32
    %cst_5 = arith.constant 3.100000e+01 : f32
    %11 = arith.divf %cst_4, %cst_5 : f32
    %12 = vector.broadcast %11 : f32 to vector<8x1xf32>
    %13 = arith.mulf %10, %12 : vector<8x1xf32>
    %14 = math.sqrt %13 : vector<8x1xf32>
    %cst_6 = arith.constant 9.99999997E-7 : f32
    %15 = vector.broadcast %cst_6 : f32 to vector<8x1xf32>
    %16 = arith.addf %14, %15 : vector<8x1xf32>
    %17 = tpu.reciprocal %16 : vector<8x1xf32> -> vector<8x1xf32>
    %c0_7 = arith.constant 0 : index
    %c0_8 = arith.constant 0 : index
    %18 = vector.load %arg2[%c0_7, %c0_8] : memref<1x32xf32, #tpu.memory_space<vmem>>, vector<1x32xf32>
    %c0_9 = arith.constant 0 : index
    %c0_10 = arith.constant 0 : index
    %19 = vector.load %arg3[%c0_9, %c0_10] : memref<1x32xf32, #tpu.memory_space<vmem>>, vector<1x32xf32>
    %20 = vector.broadcast %18 : vector<1x32xf32> to vector<8x32xf32>
    %21 = vector.broadcast %17 : vector<8x1xf32> to vector<8x32xf32>
    %22 = arith.mulf %20, %21 : vector<8x32xf32>
    %23 = arith.mulf %7, %22 : vector<8x32xf32>
    %24 = vector.broadcast %19 : vector<1x32xf32> to vector<8x32xf32>
    %25 = arith.addf %23, %24 : vector<8x32xf32>
    %c0_11 = arith.constant 0 : index
    %c0_12 = arith.constant 0 : index
    %26 = vector.load %arg4[%c0_11, %c0_12] : memref<8x32xf32, #tpu.memory_space<vmem>>, vector<8x32xf32>
    tpu.vector_store %arg4[%c0_11, %c0_12], %25 {strides = array<i32>} : memref<8x32xf32, #tpu.memory_space<vmem>>, vector<8x32xf32>,
    return
  }
  func.func @transform_0(%arg0: i32) -> (i32, i32) {
    %c0_i32 = arith.constant 0 : i32
    %c0_i32_0 = arith.constant 0 : i32
    return %arg0, %c0_i32 : i32, i32
  }
  func.func @transform_1(%arg0: i32) -> (i32, i32) {
    %c0_i32 = arith.constant 0 : i32
    %c0_i32_0 = arith.constant 0 : i32
    %c0_i32_1 = arith.constant 0 : i32
    return %c0_i32, %c0_i32_0 : i32, i32
  }
  func.func @transform_2(%arg0: i32) -> (i32, i32) {
    %c0_i32 = arith.constant 0 : i32
    %c0_i32_0 = arith.constant 0 : i32
    %c0_i32_1 = arith.constant 0 : i32
    return %c0_i32, %c0_i32_0 : i32, i32
  }
  func.func @transform_3(%arg0: i32) -> (i32, i32) {
    %c0_i32 = arith.constant 0 : i32
    %c0_i32_0 = arith.constant 0 : i32
    return %arg0, %c0_i32 : i32, i32
  }
}

</mosaic_0001>

<llo_original>
// kernel: tpu_custom_call.1
$region0: #{tpu_custom_call.1}
  #allocation0 [shape = 'u32[]', space=smem, size = 0x4, offset = 0x4, fixed_abs, tag = 'smem constant byte address 0x4 - core index']
  #allocation1 [shape = 'u32[144,128]{1,0:T(1,128)}', space=vmem, size = 0x12000, scoped, tag = 'internal scratch']
  %s0 = inlined_call_operand.hbm [shape: f32[16,32], index: 0, kind: input, shape index: {}]
  %s1 = inlined_call_operand.vmem [shape: f32[1,32], index: 1, kind: input, shape index: {}]
  %s2 = inlined_call_operand.vmem [shape: f32[1,32], index: 2, kind: input, shape index: {}]
  %s3 = inlined_call_operand.hbm [shape: f32[16,32], index: 3, kind: output, shape index: {}]
  %s4 = sld [smem:[#allocation0]]
  $region49: #{tpu_custom_call.1} parent=0
    _
  %s6 = ssub.s32 1, %s4
  %s7 = scalar_select 0, %s6, %s4
  $region1: #{tpu_custom_call.1} parent=0
    #allocation2 [shape = 'u8[8192]{0}', space=vmem, size = 0x2000, scoped, tag = 'input window, operand 0']
    #allocation3 [shape = 's32[2]{0}', space=sflag, size = 0x8, scoped, tag = 'scoped memory for tpu_custom_call.1']
    #allocation4 [shape = 's32[2]{0}', space=sflag, size = 0x8, scoped, tag = 'scoped memory for tpu_custom_call.1']
    #allocation5 [shape = 'u8[8192]{0}', space=vmem, size = 0x2000, scoped, tag = 'output window, operand 0']
    %8 = vsyncpa [#allocation3], 0
    %s9 = scalar_lea.sflag [#allocation3], 1
    %10 = vsyncpa %s9, 0
    %11 = vsyncpa [#allocation4], 0
    %s12 = scalar_lea.sflag [#allocation4], 1
    %13 = vsyncpa %s12, 0
    loop: start=0, step=1, limit=4
    $region2: #{tpu_custom_call.1} parent=1 // loop_pre_header
      _
    $region3: #{tpu_custom_call.1} parent=1 // loop_header
      %s15 = sphi 0, %s19
      %p16 = scmp.ge.s32.totalorder %s15, 4
      %s25 = sphi 0, %s27
      %s28 = sphi 0, %s25
      %s29 = sphi 0, %s28
      %s45 = sphi 0, %s29
      %s49 = sphi 0, %s49
      %s51 = sphi 0, %s49
      %s52 = sphi 0, %s51
      %s66 = sphi 0, %s52
      %s70 = sphi 0, %s70
      %s72 = sphi 0, %s70
      %s73 = sphi 0, %s72
      %s87 = sphi 0, %s73
      %s93 = sphi 0, %s95
      %s96 = sphi 0, %s93
      %s97 = sphi 0, %s96
      %s113 = sphi 0, %s97
    $region4: #{tpu_custom_call.1} parent=1 // loop_header_branch
      %18 = sbr.rel (%p16) target = $region8
    $region5: #{tpu_custom_call.1} parent=1 // loop_body
      %s20 = ssub.s32 %s15, 1
      %s21 = ssub.s32 %s15, 2
      %s22 = sadd.s32 %s15, 1
      %s23 = ssub.s32 %s15, %s22
      %p24 = scmp.eq.s32.totalorder %s23, 0
      %s26 = sadd.s32 %s25, 1
      %s27 = scalar_select %p24, %s25, %s26
      %p30 = pneg %p24
      %p31 = scmp.eq.s32.totalorder %s15, 1
      %p32 = por %p30, %p31
      %p33 = scmp.ne.s32.totalorder %s25, %s28
      %p34 = scmp.eq.s32.totalorder %s15, 0
      %p35 = por %p33, %p34
      %p36 = scmp.ne.s32.totalorder %s25, %s28
      %p37 = scmp.eq.s32.totalorder %s20, 1
      %p38 = por %p36, %p37
      %p39 = scmp.ne.s32.totalorder %s28, %s29
      %p40 = scmp.eq.s32.totalorder %s20, 0
      %p41 = por %p39, %p40
      %p42 = scmp.ne.s32.totalorder %s28, %s29
      %p43 = scmp.eq.s32.totalorder %s21, 1
      %p44 = por %p42, %p43
      %p46 = scmp.ne.s32.totalorder %s29, %s45
      %p47 = scmp.eq.s32.totalorder %s21, 0
      %p48 = por %p46, %p47
      %s50 = sadd.s32 %s49, 1
      %p53 = scmp.eq.s32.totalorder %s15, 1
      %p54 = scmp.ne.s32.totalorder %s49, %s51
      %p55 = scmp.eq.s32.totalorder %s15, 0
      %p56 = por %p54, %p55
      %p57 = scmp.ne.s32.totalorder %s49, %s51
      %p58 = scmp.eq.s32.totalorder %s20, 1
      %p59 = por %p57, %p58
      %p60 = scmp.ne.s32.totalorder %s51, %s52
      %p61 = scmp.eq.s32.totalorder %s20, 0
      %p62 = por %p60, %p61
      %p63 = scmp.ne.s32.totalorder %s51, %s52
      %p64 = scmp.eq.s32.totalorder %s21, 1
      %p65 = por %p63, %p64
      %p67 = scmp.ne.s32.totalorder %s52, %s66
      %p68 = scmp.eq.s32.totalorder %s21, 0
      %p69 = por %p67, %p68
      %s71 = sadd.s32 %s70, 1
      %p74 = scmp.eq.s32.totalorder %s15, 1
      %p75 = scmp.ne.s32.totalorder %s70, %s72
      %p76 = scmp.eq.s32.totalorder %s15, 0
      %p77 = por %p75, %p76
      %p78 = scmp.ne.s32.totalorder %s70, %s72
      %p79 = scmp.eq.s32.totalorder %s20, 1
      %p80 = por %p78, %p79
      %p81 = scmp.ne.s32.totalorder %s72, %s73
      %p82 = scmp.eq.s32.totalorder %s20, 0
      %p83 = por %p81, %p82
      %p84 = scmp.ne.s32.totalorder %s72, %s73
      %p85 = scmp.eq.s32.totalorder %s21, 1
      %p86 = por %p84, %p85
      %p88 = scmp.ne.s32.totalorder %s73, %s87
      %p89 = scmp.eq.s32.totalorder %s21, 0
      %p90 = por %p88, %p89
      %s91 = ssub.s32 %s15, %s22
      %p92 = scmp.eq.s32.totalorder %s91, 0
      %s94 = sadd.s32 %s93, 1
      %s95 = scalar_select %p92, %s93, %s94
      %p98 = pneg %p92
      %p99 = scmp.eq.s32.totalorder %s15, 1
      %p100 = por %p98, %p99
      %p101 = scmp.ne.s32.totalorder %s93, %s96
      %p102 = scmp.eq.s32.totalorder %s15, 0
      %p103 = por %p101, %p102
      %p104 = scmp.ne.s32.totalorder %s93, %s96
      %p105 = scmp.eq.s32.totalorder %s20, 1
      %p106 = por %p104, %p105
      %p107 = scmp.ne.s32.totalorder %s96, %s97
      %p108 = scmp.eq.s32.totalorder %s20, 0
      %p109 = por %p107, %p108
      %p110 = scmp.ne.s32.totalorder %s96, %s97
      %p111 = scmp.eq.s32.totalorder %s21, 1
      %p112 = por %p110, %p111
      %p114 = scmp.ne.s32.totalorder %s97, %s113
      %p115 = scmp.eq.s32.totalorder %s21, 0
      %p116 = por %p114, %p115
      %p117 = scmp.le.s32.totalorder 1, %s15
      %p118 = scmp.lt.s32.totalorder %s15, 3
      %p119 = pnand %p117, %p118
      %p120 = pneg %p119
      // Predicated region
      $region9: #{tpu_custom_call.1} parent=5 // pred_check
        _
      $region10: #{tpu_custom_call.1} parent=5 // pred_check_branch
        %122 = sbr.rel (%p119) target = $region12
      $region11: #{tpu_custom_call.1} parent=5 // pred_region
        %s123 = ssub.s32 %s15, 1
        // Predicated region
        $region13: #{tpu_custom_call.1} parent=11 // pred_check
          %p124 = pneg %p62
        $region14: #{tpu_custom_call.1} parent=11 // pred_check_branch
          %126 = sbr.rel (%p124) target = $region16
        $region15: #{tpu_custom_call.1} parent=11 // pred_region
          _
        $region16: #{tpu_custom_call.1} parent=11 // pred_fallthru
          _
        // Predicated region
        $region17: #{tpu_custom_call.1} parent=11 // pred_check
          %p127 = pneg %p83
        $region18: #{tpu_custom_call.1} parent=11 // pred_check_branch
          %129 = sbr.rel (%p127) target = $region20
        $region19: #{tpu_custom_call.1} parent=11 // pred_region
          _
        $region20: #{tpu_custom_call.1} parent=11 // pred_fallthru
          _
      $region12: #{tpu_custom_call.1} parent=5 // pred_fallthru
        _
      %p130 = scmp.lt.s32.totalorder %s15, 2
      // Predicated region
      $region21: #{tpu_custom_call.1} parent=5 // pred_check
        %p131 = pneg %p130
      $region22: #{tpu_custom_call.1} parent=5 // pred_check_branch
        %133 = sbr.rel (%p131) target = $region24
      $region23: #{tpu_custom_call.1} parent=5 // pred_region
        // Predicated region
        $region25: #{tpu_custom_call.1} parent=23 // pred_check
          %p134 = pneg %p35
        $region26: #{tpu_custom_call.1} parent=23 // pred_check_branch
          %136 = sbr.rel (%p134) target = $region28
        $region27: #{tpu_custom_call.1} parent=23 // pred_region
          %s137 = sand.u32 %s25, 1
          %s138 = scalar_lea.sflag [#allocation3], %s137
          %s139 = sand.u32 %s25, 1
          %s140 = smul.addr %s139, 8
          %s141 = scalar_lea.vmem [#allocation2], %s140
          %s143 = ssub.s32 128, 128
          %144 = vsyncadd %s138, %s143
          %s145 = smul.addr %s15, 128
          %s146 = scalar_lea.hbm %s0, %s145
          %s148 = sshll.u32 %s141, 4
          %s149 = int_to_ptr.vmem [resolvable:$true] %s148
          %151 = dma.hbm_to_vmem [thread:$0]  %s146, 128, %s149, %s138
        $region28: #{tpu_custom_call.1} parent=23 // pred_fallthru
          _
      $region24: #{tpu_custom_call.1} parent=5 // pred_fallthru
        _
      %p152 = scmp.le.s32.totalorder 1, %s15
      %p153 = scmp.lt.s32.totalorder %s15, 3
      %p154 = pnand %p152, %p153
      %p155 = pneg %p154
      // Predicated region
      $region29: #{tpu_custom_call.1} parent=5 // pred_check
        _
      $region30: #{tpu_custom_call.1} parent=5 // pred_check_branch
        %157 = sbr.rel (%p154) target = $region32
      $region31: #{tpu_custom_call.1} parent=5 // pred_region
        %s158 = ssub.s32 %s15, 1
        %s159 = sand.u32 %s28, 1
        %s160 = scalar_lea.sflag [#allocation3], %s159
        %s161 = sand.u32 %s28, 1
        %s162 = smul.addr %s161, 8
        %s163 = scalar_lea.vmem [#allocation2], %s162
        // Predicated region
        $region33: #{tpu_custom_call.1} parent=31 // pred_check
          %p164 = pneg %p41
        $region34: #{tpu_custom_call.1} parent=31 // pred_check_branch
          %166 = sbr.rel (%p164) target = $region36
        $region35: #{tpu_custom_call.1} parent=31 // pred_region
          %167 = dma.done %s160, 128
        $region36: #{tpu_custom_call.1} parent=31 // pred_fallthru
          _
        %s168 = sand.u32 %s28, 1
        %s169 = scalar_lea.sflag [#allocation3], %s168
        %s170 = sand.u32 %s28, 1
        %s171 = smul.addr %s170, 8
        %s172 = scalar_lea.vmem [#allocation2], %s171
        %p173 = pneg %p41
        %p174 = pneg %p38
        %p175 = pneg %p62
        %p176 = pneg %p59
        %p177 = pneg %p83
        %p178 = pneg %p80
        %p179 = pneg %p109
        %p180 = pneg %p106
        %s181 = sand.u32 %s96, 1
        %s182 = scalar_lea.sflag [#allocation4], %s181
        %s183 = sand.u32 %s96, 1
        %s184 = smul.addr %s183, 8
        %s185 = scalar_lea.vmem [#allocation5], %s184
        %v186 = vld [vmem:[%s163] sm:$0xff]
        %vm187 = vcmask 261120
        %v188 = vsel %vm187, %v186, 0.0
        %189 = vadd.xlane.f32.xlu0 %v188
        %v190 = vpop.xlane.xlu0 %189
        %v191 = vmul.f32 %v190, 0.03125
        %v192 = vsub.f32 %v186, %v191
        %v193 = vmul.f32 %v192, %v192
        %v194 = vsel %vm187, %v193, 0.0
        %195 = vadd.xlane.f32.xlu0 %v194
        %v196 = vpop.xlane.xlu0 %195
        %v197 = vmul.f32 %v196, 0.032258064
        %v198 = vrsqrt.pop %v197
        %v199 = vmul.f32 %v197, %v198
        %vm200 = vcmp.eq.f32.partialorder %v197, inf
        %v201 = vsel %vm200, %v197, %v199
        %vm202 = vcmp.eq.f32.partialorder %v197, 0.0
        %v203 = vand.u32 %v197, 2147483648
        %v204 = vsel %vm202, %v203, %v201
        %v205 = vadd.f32 %v204, 1e-06
        %v206 = vrcp.pop %v205
        %v207 = vld [vmem:[%s1] sm:$0x1]
        %v208 = vld [vmem:[%s2] sm:$0x1]
        %v210 = vlaneseq
        %v211 = vshrl.u32 %v210, 7
        %v212 = vsub.s32 0, %v211
        %v213 = vrot.slane %v207, %v212
        %v215 = vmul.f32 %v213, %v206
        %v216 = vmul.f32 %v192, %v215
        %v218 = vlaneseq
        %v219 = vshrl.u32 %v218, 7
        %v220 = vsub.s32 0, %v219
        %v221 = vrot.slane %v208, %v220
        %v223 = vadd.f32 %v216, %v221
        %224 = vst.msk [vmem:[%s185] sm:$0xff] %vm187, %v223
        %s225 = sand.u32 %s96, 1
        %s226 = scalar_lea.sflag [#allocation4], %s225
        %s227 = sand.u32 %s96, 1
        %s228 = smul.addr %s227, 8
        %s229 = scalar_lea.vmem [#allocation5], %s228
        // Predicated region
        $region37: #{tpu_custom_call.1} parent=31 // pred_check
          %p230 = pneg %p106
        $region38: #{tpu_custom_call.1} parent=31 // pred_check_branch
          %232 = sbr.rel (%p230) target = $region40
        $region39: #{tpu_custom_call.1} parent=31 // pred_region
          %s234 = ssub.s32 128, 128
          %235 = vsyncadd %s226, %s234
          %s236 = smul.addr %s20, 128
          %s237 = scalar_lea.hbm %s3, %s236
          %s239 = sshll.u32 %s229, 4
          %s240 = int_to_ptr.vmem [resolvable:$true] %s239
          %242 = dma.vmem_to_hbm [thread:$0]  %s240, 128, %s237, %s226
        $region40: #{tpu_custom_call.1} parent=31 // pred_fallthru
          _
      $region32: #{tpu_custom_call.1} parent=5 // pred_fallthru
        _
      %p243 = scmp.le.s32.totalorder 2, %s15
      // Predicated region
      $region41: #{tpu_custom_call.1} parent=5 // pred_check
        %p244 = pneg %p243
      $region42: #{tpu_custom_call.1} parent=5 // pred_check_branch
        %246 = sbr.rel (%p244) target = $region44
      $region43: #{tpu_custom_call.1} parent=5 // pred_region
        %s247 = ssub.s32 %s15, 2
        // Predicated region
        $region45: #{tpu_custom_call.1} parent=43 // pred_check
          %p248 = pneg %p112
        $region46: #{tpu_custom_call.1} parent=43 // pred_check_branch
          %250 = sbr.rel (%p248) target = $region48
        $region47: #{tpu_custom_call.1} parent=43 // pred_region
          %s251 = sand.u32 %s97, 1
          %s252 = scalar_lea.sflag [#allocation4], %s251
          %s253 = sand.u32 %s97, 1
          %s254 = smul.addr %s253, 8
          %s255 = scalar_lea.vmem [#allocation5], %s254
          %256 = dma.done %s252, 128
        $region48: #{tpu_custom_call.1} parent=43 // pred_fallthru
          _
      $region44: #{tpu_custom_call.1} parent=5 // pred_fallthru
        _
    $region6: #{tpu_custom_call.1} parent=1 // loop_footer
      %s19 = sadd.s32 1, %s15
    $region7: #{tpu_custom_call.1} parent=1 // loop_footer_branch
      %14 = sbr.rel target = $region3
    $region8: #{tpu_custom_call.1} parent=1 // loop_exit
      _
    %257 = vsyncpa [#allocation3], 1
    %s258 = scalar_lea.sflag [#allocation3], 1
    %259 = vsyncpa %s258, 1
    %260 = vsyncpa [#allocation4], 1
    %s261 = scalar_lea.sflag [#allocation4], 1
    %262 = vsyncpa %s261, 1

</llo_original>
